<compile_context>
chip_gen: v7x
topology: tpu7x:2x2x1
jax: 0.10.0
libtpu: 0.0.40
codegen_flags: <defaults>
</compile_context>

<pallas_src>
import math
from functools import partial

import jax
import jax.numpy as jnp
from jax import lax
from jax.experimental import pallas as pl
from jax.experimental.pallas import tpu as pltpu


# --------------------------------------------------------------------------- #
# Kernel body (shared by the single-invocation and batch-grid paths).
# Refs:
#   q/k/v_ref : (nb, T, C)   nb = B (no grid) or 1 (grid over batch)
#   wq_t      : (C, C)  = wq.T * (1/sqrt(hd))   (scale folded at prep time)
#   bq        : (1, C)  = bq  * (1/sqrt(hd))
#   wk_t/wv_t : (C, C)  = wk.T / wv.T
#   bk/bv     : (1, C)
#   wf_t      : (C, C)  = wf.T
#   bf        : (1, C)
#   o_ref     : (nb, T, C)
# --------------------------------------------------------------------------- #
def _attn_kernel(H, q_ref, k_ref, v_ref,
                 wq_t, bq, wk_t, bk, wv_t, bv, wf_t, bf, o_ref):
    nb, T, C = q_ref.shape
    hd = C // H
    NEG = jnp.float32(-1e30)  # finite: exp underflows to exactly 0 (== -inf ref)

    q2 = q_ref[...].reshape(nb * T, C)
    k2 = k_ref[...].reshape(nb * T, C)
    v2 = v_ref[...].reshape(nb * T, C)

    # Three small MXU matmuls, f32 accumulation (scale already folded into wq_t/bq).
    Q = jnp.dot(q2, wq_t[...], preferred_element_type=jnp.float32) + bq[...]
    K = jnp.dot(k2, wk_t[...], preferred_element_type=jnp.float32) + bk[...]
    V = jnp.dot(v2, wv_t[...], preferred_element_type=jnp.float32) + bv[...]

    # Causal mask from 2-D iota (O(T^2) per call; tile-local when KV-tiled later).
    row = lax.broadcasted_iota(jnp.int32, (T, T), 0)
    col = lax.broadcasted_iota(jnp.int32, (T, T), 1)
    causal = col <= row

    if H == 1:
        # Module forces n_heads=1 whenever config.n_heads < emb_dim.
        Qb = Q.reshape(nb, T, hd)
        Kb = K.reshape(nb, T, hd)
        Vb = V.reshape(nb, T, hd)
        s = jnp.einsum('bqd,bkd->bqk', Qb, Kb,
                       preferred_element_type=jnp.float32)
        s = jnp.where(causal[None], s, NEG)
        m = jnp.max(s, axis=-1, keepdims=True)
        e = jnp.exp(s - m)
        p = e * pl.reciprocal(jnp.sum(e, axis=-1, keepdims=True), approx=True)
        ctx = jnp.einsum('bqk,bkd->bqd', p, Vb,
                         preferred_element_type=jnp.float32)
        ctx2 = ctx.reshape(nb * T, C)
    else:
        # Generic multi-head path: heads stay an einsum axis — pure reshapes,
        # no (B,T,H,hd)->(B,H,T,hd) transposes materialized in VMEM.
        Qh = Q.reshape(nb, T, H, hd)
        Kh = K.reshape(nb, T, H, hd)
        Vh = V.reshape(nb, T, H, hd)
        s = jnp.einsum('bqhd,bkhd->bhqk', Qh, Kh,
                       preferred_element_type=jnp.float32)
        s = jnp.where(causal[None, None], s, NEG)
        m = jnp.max(s, axis=-1, keepdims=True)
        e = jnp.exp(s - m)
        p = e * pl.reciprocal(jnp.sum(e, axis=-1, keepdims=True), approx=True)
        ctx = jnp.einsum('bhqk,bkhd->bqhd', p, Vh,
                         preferred_element_type=jnp.float32)
        ctx2 = ctx.reshape(nb * T, C)

    out = jnp.dot(ctx2, wf_t[...], preferred_element_type=jnp.float32) + bf[...]
    o_ref[...] = out.reshape(nb, T, C).astype(o_ref.dtype)


# --------------------------------------------------------------------------- #
# One-time parameter preparation (hoisted out of the per-call path).
# Takes PyTorch-layout (out, in) weights + 1-D biases.
# --------------------------------------------------------------------------- #
def prepare_params(params, *, n_heads: int):
    C = params["wq"].shape[0]
    hd = C // n_heads
    scale = jnp.float32(1.0 / math.sqrt(hd))
    return {
        "wq_t": (params["wq"].T * scale).astype(jnp.float32),   # scale folded
        "bq":   (params["bq"] * scale).reshape(1, C).astype(jnp.float32),
        "wk_t": params["wk"].T.astype(jnp.float32),
        "bk":   params["bk"].reshape(1, C).astype(jnp.float32),
        "wv_t": params["wv"].T.astype(jnp.float32),
        "bv":   params["bv"].reshape(1, C).astype(jnp.float32),
        "wf_t": params["wf"].T.astype(jnp.float32),
        "bf":   params["bf"].reshape(1, C).astype(jnp.float32),
    }


# --------------------------------------------------------------------------- #
# Forward wrapper.
#   use_batch_grid=False : single VMEM-resident invocation (best at toy sizes).
#   use_batch_grid=True  : grid=(B,) with "parallel" semantics so v7x's two
#                          TensorCores split the batch at real batch sizes.
# --------------------------------------------------------------------------- #
def causal_self_attention(q, k, v, prepped, *, n_heads: int, use_batch_grid=None):
    B, T, C = q.shape
    if use_batch_grid is None:
        use_batch_grid = B >= 8  # per-step overhead only amortizes at real batch

    kernel = partial(_attn_kernel, n_heads)
    weight_args = (prepped["wq_t"], prepped["bq"],
                   prepped["wk_t"], prepped["bk"],
                   prepped["wv_t"], prepped["bv"],
                   prepped["wf_t"], prepped["bf"])

    if not use_batch_grid:
        # Whole problem (~tens of KB here) resident in VMEM, one invocation.
        return pl.pallas_call(
            kernel,
            out_shape=jax.ShapeDtypeStruct((B, T, C), q.dtype),
        )(q, k, v, *weight_args)

    # Batch-parallel grid: one batch row per step; weights stay resident
    # (index_map is constant, so their blocks are not re-DMA'd per step).
    qkv_spec = pl.BlockSpec((1, T, C), lambda b: (b, 0, 0))
    w_spec = pl.BlockSpec((C, C), lambda b: (0, 0))
    b_spec = pl.BlockSpec((1, C), lambda b: (0, 0))
    return pl.pallas_call(
        kernel,
        out_shape=jax.ShapeDtypeStruct((B, T, C), q.dtype),
        grid=(B,),
        in_specs=[qkv_spec, qkv_spec, qkv_spec,
                  w_spec, b_spec, w_spec, b_spec, w_spec, b_spec,
                  w_spec, b_spec],
        out_specs=pl.BlockSpec((1, T, C), lambda b: (b, 0, 0)),
        compiler_params=pltpu.CompilerParams(
            dimension_semantics=("parallel",)),
    )(q, k, v, *weight_args)


# --------------------------------------------------------------------------- #
# Pure-JAX reference mirroring the PyTorch forward exactly (unprepped params).
# --------------------------------------------------------------------------- #
def reference_attention(q, k, v, params, *, n_heads: int):
    B, T, C = q.shape
    hd = C // n_heads
    Q = q @ params["wq"].T + params["bq"]
    K = k @ params["wk"].T + params["bk"]
    V = v @ params["wv"].T + params["bv"]
    Q = Q.reshape(B, T, n_heads, hd).transpose(0, 2, 1, 3)
    K = K.reshape(B, T, n_heads, hd).transpose(0, 2, 1, 3)
    V = V.reshape(B, T, n_heads, hd).transpose(0, 2, 1, 3)
    s = (Q @ jnp.swapaxes(K, -2, -1)) * (1.0 / math.sqrt(hd))
    mask = jnp.tril(jnp.ones((T, T), dtype=bool))
    s = jnp.where(mask[None, None], s, -jnp.inf)
    p = jax.nn.softmax(s, axis=-1)
    o = (p @ V).transpose(0, 2, 1, 3).reshape(B, T, C)
    return o @ params["wf"].T + params["bf"]


if __name__ == "__main__":
    # config: emb_dim=32, n_heads=4, seq_len=8  ->  module forces n_heads=1 (4 < 32)
    B, T, C = 2, 8, 32
    cfg_n_heads, emb_dim = 4, C
    n_heads = 1 if cfg_n_heads < emb_dim else cfg_n_heads

    key = jax.random.PRNGKey(0)
    keys = jax.random.split(key, 16)

    bound = 1.0 / math.sqrt(C)  # PyTorch nn.Linear default init scale
    params = {
        "wq": jax.random.uniform(keys[0], (C, C), jnp.float32, -bound, bound),
        "bq": jax.random.uniform(keys[1], (C,), jnp.float32, -bound, bound),
        "wk": jax.random.uniform(keys[2], (C, C), jnp.float32, -bound, bound),
        "bk": jax.random.uniform(keys[3], (C,), jnp.float32, -bound, bound),
        "wv": jax.random.uniform(keys[4], (C, C), jnp.float32, -bound, bound),
        "bv": jax.random.uniform(keys[5], (C,), jnp.float32, -bound, bound),
        "wf": jax.random.uniform(keys[6], (C, C), jnp.float32, -bound, bound),
        "bf": jax.random.uniform(keys[7], (C,), jnp.float32, -bound, bound),
    }
    # Layout prep done ONCE (transposes, bias reshape, scale folding).
    prepped = prepare_params(params, n_heads=n_heads)

    q = jax.random.normal(keys[8], (B, T, C), jnp.float32)
    k = jax.random.normal(keys[9], (B, T, C), jnp.float32)
    v = jax.random.normal(keys[10], (B, T, C), jnp.float32)

    # --- toy size: single VMEM-resident invocation ---
    fwd = jax.jit(partial(causal_self_attention, n_heads=n_heads))
    out = jax.block_until_ready(fwd(q, k, v, prepped))
    ref = reference_attention(q, k, v, params, n_heads=n_heads)
    assert out.shape == (B, T, C)
    # approx=True reciprocal in the softmax -> slightly relaxed tolerance
    assert jnp.allclose(out, ref, atol=5e-3, rtol=5e-3), "single-call mismatch"

    # --- larger batch: batch-parallel grid path (v7x 2-TC / megacore) ---
    B2 = 8
    q2 = jax.random.normal(keys[11], (B2, T, C), jnp.float32)
    k2 = jax.random.normal(keys[12], (B2, T, C), jnp.float32)
    v2 = jax.random.normal(keys[13], (B2, T, C), jnp.float32)
    fwd_grid = jax.jit(partial(causal_self_attention, n_heads=n_heads,
                               use_batch_grid=True))
    out2 = jax.block_until_ready(fwd_grid(q2, k2, v2, prepped))
    ref2 = reference_attention(q2, k2, v2, params, n_heads=n_heads)
    assert jnp.allclose(out2, ref2, atol=5e-3, rtol=5e-3), "grid-path mismatch"

    print("KERNEL_OK")
</pallas_src>

<mosaic_0001>
module attributes {stable_mosaic.version = 11 : i64} {
  func.func @_attn_kernel(%arg0: memref<2x8x32xf32, #tpu.memory_space<vmem>>, %arg1: memref<2x8x32xf32, #tpu.memory_space<vmem>>, %arg2: memref<2x8x32xf32, #tpu.memory_space<vmem>>, %arg3: memref<32x32xf32, #tpu.memory_space<vmem>>, %arg4: memref<1x32xf32, #tpu.memory_space<vmem>>, %arg5: memref<32x32xf32, #tpu.memory_space<vmem>>, %arg6: memref<1x32xf32, #tpu.memory_space<vmem>>, %arg7: memref<32x32xf32, #tpu.memory_space<vmem>>, %arg8: memref<1x32xf32, #tpu.memory_space<vmem>>, %arg9: memref<32x32xf32, #tpu.memory_space<vmem>>, %arg10: memref<1x32xf32, #tpu.memory_space<vmem>>, %arg11: memref<2x8x32xf32, #tpu.memory_space<vmem>>) attributes {dimension_semantics = [], scalar_prefetch = 0 : i64, scratch_operands = 0 : i64, tpu.core_type = #tpu.core_type<tc>} {
    %c0 = arith.constant 0 : index
    %c0_0 = arith.constant 0 : index
    %c0_1 = arith.constant 0 : index
    %0 = vector.load %arg0[%c0, %c0_0, %c0_1] : memref<2x8x32xf32, #tpu.memory_space<vmem>>, vector<2x8x32xf32>
    %1 = vector.shape_cast %0 : vector<2x8x32xf32> to vector<16x32xf32>
    %c0_2 = arith.constant 0 : index
    %c0_3 = arith.constant 0 : index
    %c0_4 = arith.constant 0 : index
    %2 = vector.load %arg1[%c0_2, %c0_3, %c0_4] : memref<2x8x32xf32, #tpu.memory_space<vmem>>, vector<2x8x32xf32>
    %3 = vector.shape_cast %2 : vector<2x8x32xf32> to vector<16x32xf32>
    %c0_5 = arith.constant 0 : index
    %c0_6 = arith.constant 0 : index
    %c0_7 = arith.constant 0 : index
    %4 = vector.load %arg2[%c0_5, %c0_6, %c0_7] : memref<2x8x32xf32, #tpu.memory_space<vmem>>, vector<2x8x32xf32>
    %5 = vector.shape_cast %4 : vector<2x8x32xf32> to vector<16x32xf32>
    %c0_8 = arith.constant 0 : index
    %c0_9 = arith.constant 0 : index
    %6 = vector.load %arg3[%c0_8, %c0_9] : memref<32x32xf32, #tpu.memory_space<vmem>>, vector<32x32xf32>
    %cst = arith.constant dense<0.000000e+00> : vector<16x32xf32>
    %7 = tpu.matmul %1, %6, %cst {dimension_numbers = #tpu.dot_dimension_numbers<[1], [0], [0], [1], [0, 0, 1, 1], [], []>} : vector<16x32xf32>, vector<32x32xf32>, vector<16x32xf32> -> vector<16x32xf32>
    %c0_10 = arith.constant 0 : index
    %c0_11 = arith.constant 0 : index
    %8 = vector.load %arg4[%c0_10, %c0_11] : memref<1x32xf32, #tpu.memory_space<vmem>>, vector<1x32xf32>
    %9 = vector.broadcast %8 : vector<1x32xf32> to vector<16x32xf32>
    %10 = arith.addf %7, %9 : vector<16x32xf32>
    %c0_12 = arith.constant 0 : index
    %c0_13 = arith.constant 0 : index
    %11 = vector.load %arg5[%c0_12, %c0_13] : memref<32x32xf32, #tpu.memory_space<vmem>>, vector<32x32xf32>
    %cst_14 = arith.constant dense<0.000000e+00> : vector<16x32xf32>
    %12 = tpu.matmul %3, %11, %cst_14 {dimension_numbers = #tpu.dot_dimension_numbers<[1], [0], [0], [1], [0, 0, 1, 1], [], []>} : vector<16x32xf32>, vector<32x32xf32>, vector<16x32xf32> -> vector<16x32xf32>
    %c0_15 = arith.constant 0 : index
    %c0_16 = arith.constant 0 : index
    %13 = vector.load %arg6[%c0_15, %c0_16] : memref<1x32xf32, #tpu.memory_space<vmem>>, vector<1x32xf32>
    %14 = vector.broadcast %13 : vector<1x32xf32> to vector<16x32xf32>
    %15 = arith.addf %12, %14 : vector<16x32xf32>
    %c0_17 = arith.constant 0 : index
    %c0_18 = arith.constant 0 : index
    %16 = vector.load %arg7[%c0_17, %c0_18] : memref<32x32xf32, #tpu.memory_space<vmem>>, vector<32x32xf32>
    %cst_19 = arith.constant dense<0.000000e+00> : vector<16x32xf32>
    %17 = tpu.matmul %5, %16, %cst_19 {dimension_numbers = #tpu.dot_dimension_numbers<[1], [0], [0], [1], [0, 0, 1, 1], [], []>} : vector<16x32xf32>, vector<32x32xf32>, vector<16x32xf32> -> vector<16x32xf32>
    %c0_20 = arith.constant 0 : index
    %c0_21 = arith.constant 0 : index
    %18 = vector.load %arg8[%c0_20, %c0_21] : memref<1x32xf32, #tpu.memory_space<vmem>>, vector<1x32xf32>
    %19 = vector.broadcast %18 : vector<1x32xf32> to vector<16x32xf32>
    %20 = arith.addf %17, %19 : vector<16x32xf32>
    %21 = tpu.iota {dimensions = array<i32: 0>} : vector<8x8xi32>
    %22 = tpu.iota {dimensions = array<i32: 1>} : vector<8x8xi32>
    %23 = arith.cmpi sle, %22, %21 : vector<8x8xi32>
    %24 = vector.shape_cast %10 : vector<16x32xf32> to vector<2x8x32xf32>
    %25 = vector.shape_cast %15 : vector<16x32xf32> to vector<2x8x32xf32>
    %26 = vector.shape_cast %20 : vector<16x32xf32> to vector<2x8x32xf32>
    "tpu.trace_start"() <{level = 10 : i32, message = "bqd,bkd->bqk"}> : () -> ()
    %cst_22 = arith.constant dense<0.000000e+00> : vector<2x8x8xf32>
    %27 = tpu.matmul %24, %25, %cst_22 {dimension_numbers = #tpu.dot_dimension_numbers<[2], [2], [1], [1], [0, 0, 0, 1, 1, 1], [0], [0]>} : vector<2x8x32xf32>, vector<2x8x32xf32>, vector<2x8x8xf32> -> vector<2x8x8xf32>
    "tpu.trace_stop"() : () -> ()
    %28 = vector.shape_cast %23 : vector<8x8xi1> to vector<1x8x8xi1>
    %cst_23 = arith.constant -1.000000e+30 : f32
    %29 = vector.shape_cast %28 : vector<1x8x8xi1> to vector<1x8x8xi1>
    %30 = vector.broadcast %29 : vector<1x8x8xi1> to vector<2x8x8xi1>
    %31 = vector.broadcast %cst_23 : f32 to vector<2x8x8xf32>
    %32 = arith.select %30, %27, %31 : vector<2x8x8xi1>, vector<2x8x8xf32>
    %cst_24 = arith.constant dense<0xFF800000> : vector<2x8xf32>
    %33 = vector.multi_reduction <maximumf>, %32, %cst_24 [2] : vector<2x8x8xf32> to vector<2x8xf32>
    %34 = vector.shape_cast %33 : vector<2x8xf32> to vector<2x8x1xf32>
    %35 = vector.broadcast %34 : vector<2x8x1xf32> to vector<2x8x8xf32>
    %36 = arith.subf %32, %35 : vector<2x8x8xf32>
    %37 = math.exp %36 : vector<2x8x8xf32>
    %cst_25 = arith.constant dense<0.000000e+00> : vector<2x8xf32>
    %38 = vector.multi_reduction <add>, %37, %cst_25 [2] : vector<2x8x8xf32> to vector<2x8xf32>
    %39 = vector.shape_cast %38 : vector<2x8xf32> to vector<2x8x1xf32>
    %40 = tpu.reciprocal %39 {approx = true} : vector<2x8x1xf32> -> vector<2x8x1xf32>
    %41 = vector.broadcast %40 : vector<2x8x1xf32> to vector<2x8x8xf32>
    %42 = arith.mulf %37, %41 : vector<2x8x8xf32>
    "tpu.trace_start"() <{level = 10 : i32, message = "bqk,bkd->bqd"}> : () -> ()
    %cst_26 = arith.constant dense<0.000000e+00> : vector<2x8x32xf32>
    %43 = tpu.matmul %42, %26, %cst_26 {dimension_numbers = #tpu.dot_dimension_numbers<[2], [1], [1], [2], [0, 0, 0, 1, 1, 2], [0], [0]>} : vector<2x8x8xf32>, vector<2x8x32xf32>, vector<2x8x32xf32> -> vector<2x8x32xf32>
    "tpu.trace_stop"() : () -> ()
    %44 = vector.shape_cast %43 : vector<2x8x32xf32> to vector<16x32xf32>
    %c0_27 = arith.constant 0 : index
    %c0_28 = arith.constant 0 : index
    %45 = vector.load %arg9[%c0_27, %c0_28] : memref<32x32xf32, #tpu.memory_space<vmem>>, vector<32x32xf32>
    %cst_29 = arith.constant dense<0.000000e+00> : vector<16x32xf32>
    %46 = tpu.matmul %44, %45, %cst_29 {dimension_numbers = #tpu.dot_dimension_numbers<[1], [0], [0], [1], [0, 0, 1, 1], [], []>} : vector<16x32xf32>, vector<32x32xf32>, vector<16x32xf32> -> vector<16x32xf32>
    %c0_30 = arith.constant 0 : index
    %c0_31 = arith.constant 0 : index
    %47 = vector.load %arg10[%c0_30, %c0_31] : memref<1x32xf32, #tpu.memory_space<vmem>>, vector<1x32xf32>
    %48 = vector.broadcast %47 : vector<1x32xf32> to vector<16x32xf32>
    %49 = arith.addf %46, %48 : vector<16x32xf32>
    %50 = vector.shape_cast %49 : vector<16x32xf32> to vector<2x8x32xf32>
    %c0_32 = arith.constant 0 : index
    %c0_33 = arith.constant 0 : index
    %c0_34 = arith.constant 0 : index
    %51 = vector.load %arg11[%c0_32, %c0_33, %c0_34] : memref<2x8x32xf32, #tpu.memory_space<vmem>>, vector<2x8x32xf32>
    tpu.vector_store %arg11[%c0_32, %c0_33, %c0_34], %50 {strides = array<i32>} : memref<2x8x32xf32, #tpu.memory_space<vmem>>, vector<2x8x32xf32>,
    return
  }
}

</mosaic_0001>

<llo_original>
// kernel: causal_self_attention.1
$region0: #{causal_self_attention.1}
  #allocation0 [shape = 'u32[]', space=smem, size = 0x4, offset = 0x4, fixed_abs, tag = 'smem constant byte address 0x4 - core index']
  #allocation1 [shape = 'u32[144,128]{1,0:T(1,128)}', space=vmem, size = 0x12000, scoped, tag = 'internal scratch']
  %s0 = inlined_call_operand.hbm [shape: f32[2,8,32], index: 0, kind: input, shape index: {}]
  %s1 = inlined_call_operand.hbm [shape: f32[2,8,32], index: 1, kind: input, shape index: {}]
  %s2 = inlined_call_operand.hbm [shape: f32[2,8,32], index: 2, kind: input, shape index: {}]
  %s3 = inlined_call_operand.vmem [shape: f32[32,32], index: 3, kind: input, shape index: {}]
  %s4 = inlined_call_operand.vmem [shape: f32[1,32], index: 4, kind: input, shape index: {}]
  %s5 = inlined_call_operand.hbm [shape: f32[32,32], index: 5, kind: input, shape index: {}]
  %s6 = inlined_call_operand.vmem [shape: f32[1,32], index: 6, kind: input, shape index: {}]
  %s7 = inlined_call_operand.hbm [shape: f32[32,32], index: 7, kind: input, shape index: {}]
  %s8 = inlined_call_operand.hbm [shape: f32[1,32], index: 8, kind: input, shape index: {}]
  %s9 = inlined_call_operand.hbm [shape: f32[32,32], index: 9, kind: input, shape index: {}]
  %s10 = inlined_call_operand.hbm [shape: f32[1,32], index: 10, kind: input, shape index: {}]
  %s11 = inlined_call_operand.hbm [shape: f32[2,8,32], index: 11, kind: output, shape index: {}]
  %s12 = sld [smem:[#allocation0]]
  $region86: #{causal_self_attention.1} parent=0
    _
  %s14 = ssub.s32 1, %s12
  %s15 = scalar_select 0, %s14, %s12
  $region1: #{causal_self_attention.1} parent=0
    #allocation2 [shape = 'u8[8192]{0}', space=vmem, size = 0x2000, scoped, tag = 'input window, operand 0, single buffered']
    #allocation3 [shape = 's32[1]{0}', space=sflag, size = 0x4, scoped, tag = 'scoped memory for causal_self_attention.1']
    #allocation4 [shape = 's32[1]{0}', space=sflag, size = 0x4, scoped, tag = 'scoped memory for causal_self_attention.1']
    #allocation5 [shape = 'u8[8192]{0}', space=vmem, size = 0x2000, scoped, tag = 'input window, operand 1, single buffered']
    #allocation6 [shape = 's32[1]{0}', space=sflag, size = 0x4, scoped, tag = 'scoped memory for causal_self_attention.1']
    #allocation7 [shape = 'u8[8192]{0}', space=vmem, size = 0x2000, scoped, tag = 'input window, operand 2, single buffered']
    #allocation8 [shape = 'u8[16384]{0}', space=vmem, size = 0x4000, scoped, tag = 'input window, operand 5, single buffered']
    #allocation9 [shape = 's32[1]{0}', space=sflag, size = 0x4, scoped, tag = 'scoped memory for causal_self_attention.1']
    #allocation10 [shape = 'u8[16384]{0}', space=vmem, size = 0x4000, scoped, tag = 'input window, operand 7, single buffered']
    #allocation11 [shape = 'u8[512]{0}', space=vmem, size = 0x400, scoped, tag = 'input window, operand 8, single buffered']
    #allocation12 [shape = 's32[1]{0}', space=sflag, size = 0x4, scoped, tag = 'scoped memory for causal_self_attention.1']
    #allocation13 [shape = 'u8[16384]{0}', space=vmem, size = 0x4000, scoped, tag = 'input window, operand 9, single buffered']
    #allocation14 [shape = 'u8[512]{0}', space=vmem, size = 0x400, scoped, tag = 'input window, operand 10, single buffered']
    #allocation15 [shape = 's32[1]{0}', space=sflag, size = 0x4, scoped, tag = 'scoped memory for causal_self_attention.1']
    #allocation16 [shape = 'u8[8192]{0}', space=vmem, size = 0x2000, scoped, tag = 'output window, operand 0, single buffered']
    %16 = vsyncpa [#allocation3], 0
    %17 = vsyncpa [#allocation6], 0
    %18 = vsyncpa [#allocation9], 0
    %19 = vsyncpa [#allocation12], 0
    %20 = vsyncpa [#allocation15], 0
    %21 = vsyncpa [#allocation4], 0
    // Predicated region
    $region2: #{causal_self_attention.1} parent=1 // pred_check
      _
    $region3: #{causal_self_attention.1} parent=1 // pred_check_branch
      %23 = sbr.rel (0) target = $region5
    $region4: #{causal_self_attention.1} parent=1 // pred_region
      %s25 = ssub.s32 256, 256
      %26 = vsyncadd [#allocation3], %s25
      %s27 = sshll.u32 [#allocation2], 4
      %s28 = int_to_ptr.vmem [resolvable:$true] %s27
      %33 = dma.hbm_to_vmem [thread:$0]  %s0, 256, %s28, [#allocation3], 128, 128, 8
    $region5: #{causal_self_attention.1} parent=1 // pred_fallthru
      _
    // Predicated region
    $region6: #{causal_self_attention.1} parent=1 // pred_check
      _
    $region7: #{causal_self_attention.1} parent=1 // pred_check_branch
      %35 = sbr.rel (0) target = $region9
    $region8: #{causal_self_attention.1} parent=1 // pred_region
      %s37 = ssub.s32 256, 256
      %38 = vsyncadd [#allocation6], %s37
      %s39 = sshll.u32 [#allocation5], 4
      %s40 = int_to_ptr.vmem [resolvable:$true] %s39
      %45 = dma.hbm_to_vmem [thread:$0]  %s1, 256, %s40, [#allocation6], 128, 128, 8
    $region9: #{causal_self_attention.1} parent=1 // pred_fallthru
      _
    // Predicated region
    $region10: #{causal_self_attention.1} parent=1 // pred_check
      _
    $region11: #{causal_self_attention.1} parent=1 // pred_check_branch
      %47 = sbr.rel (0) target = $region13
    $region12: #{causal_self_attention.1} parent=1 // pred_region
      %s49 = ssub.s32 256, 256
      %50 = vsyncadd [#allocation6], %s49
      %s51 = sshll.u32 [#allocation7], 4
      %s52 = int_to_ptr.vmem [resolvable:$true] %s51
      %57 = dma.hbm_to_vmem [thread:$0]  %s2, 256, %s52, [#allocation6], 128, 128, 8
    $region13: #{causal_self_attention.1} parent=1 // pred_fallthru
      _
    // Predicated region
    $region14: #{causal_self_attention.1} parent=1 // pred_check
      _
    $region15: #{causal_self_attention.1} parent=1 // pred_check_branch
      %59 = sbr.rel (0) target = $region17
    $region16: #{causal_self_attention.1} parent=1 // pred_region
      _
    $region17: #{causal_self_attention.1} parent=1 // pred_fallthru
      _
    // Predicated region
    $region18: #{causal_self_attention.1} parent=1 // pred_check
      _
    $region19: #{causal_self_attention.1} parent=1 // pred_check_branch
      %61 = sbr.rel (0) target = $region21
    $region20: #{causal_self_attention.1} parent=1 // pred_region
      _
    $region21: #{causal_self_attention.1} parent=1 // pred_fallthru
      _
    // Predicated region
    $region22: #{causal_self_attention.1} parent=1 // pred_check
      _
    $region23: #{causal_self_attention.1} parent=1 // pred_check_branch
      %63 = sbr.rel (0) target = $region25
    $region24: #{causal_self_attention.1} parent=1 // pred_region
      %s65 = ssub.s32 512, 512
      %66 = vsyncadd [#allocation9], %s65
      %s67 = sshll.u32 [#allocation8], 4
      %s68 = int_to_ptr.vmem [resolvable:$true] %s67
      %73 = dma.hbm_to_vmem [thread:$0]  %s5, 512, %s68, [#allocation9], 128, 128, 8
    $region25: #{causal_self_attention.1} parent=1 // pred_fallthru
      _
    // Predicated region
    $region26: #{causal_self_attention.1} parent=1 // pred_check
      _
    $region27: #{causal_self_attention.1} parent=1 // pred_check_branch
      %75 = sbr.rel (0) target = $region29
    $region28: #{causal_self_attention.1} parent=1 // pred_region
      _
    $region29: #{causal_self_attention.1} parent=1 // pred_fallthru
      _
    // Predicated region
    $region30: #{causal_self_attention.1} parent=1 // pred_check
      _
    $region31: #{causal_self_attention.1} parent=1 // pred_check_branch
      %77 = sbr.rel (0) target = $region33
    $region32: #{causal_self_attention.1} parent=1 // pred_region
      %s79 = ssub.s32 512, 512
      %80 = vsyncadd [#allocation9], %s79
      %s81 = sshll.u32 [#allocation10], 4
      %s82 = int_to_ptr.vmem [resolvable:$true] %s81
      %87 = dma.hbm_to_vmem [thread:$0]  %s7, 512, %s82, [#allocation9], 128, 128, 8
    $region33: #{causal_self_attention.1} parent=1 // pred_fallthru
      _
    // Predicated region
    $region34: #{causal_self_attention.1} parent=1 // pred_check
      _
    $region35: #{causal_self_attention.1} parent=1 // pred_check_branch
      %89 = sbr.rel (0) target = $region37
    $region36: #{causal_self_attention.1} parent=1 // pred_region
      %s91 = ssub.s32 16, 16
      %92 = vsyncadd [#allocation12], %s91
      %s94 = sshll.u32 [#allocation11], 4
      %s95 = int_to_ptr.vmem [resolvable:$true] %s94
      %97 = dma.hbm_to_vmem [thread:$0]  %s8, 16, %s95, [#allocation12]
    $region37: #{causal_self_attention.1} parent=1 // pred_fallthru
      _
    // Predicated region
    $region38: #{causal_self_attention.1} parent=1 // pred_check
      _
    $region39: #{causal_self_attention.1} parent=1 // pred_check_branch
      %99 = sbr.rel (0) target = $region41
    $region40: #{causal_self_attention.1} parent=1 // pred_region
      %s101 = ssub.s32 512, 512
      %102 = vsyncadd [#allocation12], %s101
      %s103 = sshll.u32 [#allocation13], 4
      %s104 = int_to_ptr.vmem [resolvable:$true] %s103
      %109 = dma.hbm_to_vmem [thread:$0]  %s9, 512, %s104, [#allocation12], 128, 128, 8
    $region41: #{causal_self_attention.1} parent=1 // pred_fallthru
      _
    // Predicated region
    $region42: #{causal_self_attention.1} parent=1 // pred_check
      _
    $region43: #{causal_self_attention.1} parent=1 // pred_check_branch
      %111 = sbr.rel (0) target = $region45
    $region44: #{causal_self_attention.1} parent=1 // pred_region
      %s113 = ssub.s32 16, 16
      %114 = vsyncadd [#allocation15], %s113
      %s116 = sshll.u32 [#allocation14], 4
      %s117 = int_to_ptr.vmem [resolvable:$true] %s116
      %119 = dma.hbm_to_vmem [thread:$0]  %s10, 16, %s117, [#allocation15]
    $region45: #{causal_self_attention.1} parent=1 // pred_fallthru
      _
    // Predicated region
    $region46: #{causal_self_attention.1} parent=1 // pred_check
      _
    $region47: #{causal_self_attention.1} parent=1 // pred_check_branch
      %121 = sbr.rel (0) target = $region49
    $region48: #{causal_self_attention.1} parent=1 // pred_region
      %122 = dma.done [#allocation3], 256
    $region49: #{causal_self_attention.1} parent=1 // pred_fallthru
      _
    // Predicated region
    $region50: #{causal_self_attention.1} parent=1 // pred_check
      _
    $region51: #{causal_self_attention.1} parent=1 // pred_check_branch
      %124 = sbr.rel (0) target = $region53
    $region52: #{causal_self_attention.1} parent=1 // pred_region
      %125 = dma.done [#allocation6], 256
    $region53: #{causal_self_attention.1} parent=1 // pred_fallthru
      _
    // Predicated region
    $region54: #{causal_self_attention.1} parent=1 // pred_check
      _
    $region55: #{causal_self_attention.1} parent=1 // pred_check_branch
      %127 = sbr.rel (0) target = $region57
    $region56: #{causal_self_attention.1} parent=1 // pred_region
      %128 = dma.done [#allocation6], 256
    $region57: #{causal_self_attention.1} parent=1 // pred_fallthru
      _
    // Predicated region
    $region58: #{causal_self_attention.1} parent=1 // pred_check
      _
    $region59: #{causal_self_attention.1} parent=1 // pred_check_branch
      %130 = sbr.rel (0) target = $region61
    $region60: #{causal_self_attention.1} parent=1 // pred_region
      %131 = dma.done [#allocation9], 512
    $region61: #{causal_self_attention.1} parent=1 // pred_fallthru
      _
    // Predicated region
    $region62: #{causal_self_attention.1} parent=1 // pred_check
      _
    $region63: #{causal_self_attention.1} parent=1 // pred_check_branch
      %133 = sbr.rel (0) target = $region65
    $region64: #{causal_self_attention.1} parent=1 // pred_region
      %134 = dma.done [#allocation9], 512
    $region65: #{causal_self_attention.1} parent=1 // pred_fallthru
      _
    // Predicated region
    $region66: #{causal_self_attention.1} parent=1 // pred_check
      _
    $region67: #{causal_self_attention.1} parent=1 // pred_check_branch
      %136 = sbr.rel (0) target = $region69
    $region68: #{causal_self_attention.1} parent=1 // pred_region
      %137 = dma.done [#allocation12], 16
    $region69: #{causal_self_attention.1} parent=1 // pred_fallthru
      _
    // Predicated region
    $region70: #{causal_self_attention.1} parent=1 // pred_check
      _
    $region71: #{causal_self_attention.1} parent=1 // pred_check_branch
      %139 = sbr.rel (0) target = $region73
    $region72: #{causal_self_attention.1} parent=1 // pred_region
      %140 = dma.done [#allocation12], 512
    $region73: #{causal_self_attention.1} parent=1 // pred_fallthru
      _
    // Predicated region
    $region74: #{causal_self_attention.1} parent=1 // pred_check
      _
    $region75: #{causal_self_attention.1} parent=1 // pred_check_branch
      %142 = sbr.rel (0) target = $region77
    $region76: #{causal_self_attention.1} parent=1 // pred_region
      %143 = dma.done [#allocation15], 16
    $region77: #{causal_self_attention.1} parent=1 // pred_fallthru
      _
    %v144 = vld [vmem:[#allocation2] sm:$0xff]
    %v145 = vld [vmem:[#allocation2 + $0x8] sm:$0xff]
    %v146 = vld [vmem:[#allocation5] sm:$0xff]
    %v147 = vld [vmem:[#allocation5 + $0x8] sm:$0xff]
    %v148 = vld [vmem:[#allocation7] sm:$0xff]
    %v149 = vld [vmem:[#allocation7 + $0x8] sm:$0xff]
    %v150 = vld [vmem:[%s3] sm:$0xff]
    %v151 = vld [vmem:[%s3 + $0x8] sm:$0xff]
    %v152 = vld [vmem:[%s3 + $0x10] sm:$0xff]
    %v153 = vld [vmem:[%s3 + $0x18] sm:$0xff]
    %v154 = vld [vmem:[%s4] sm:$0x1]
    %v156 = vlaneseq
    %v157 = vshrl.u32 %v156, 7
    %v158 = vsub.s32 0, %v157
    %v159 = vrot.slane %v154, %v158
    %vm161 = vcmask 261120
    %v163 = vsel %vm161, %v144, 0
    %v166 = vsel %vm161, %v145, 0
    %168 = vmatprep.subr.mxu0 0.0
    %169 = vmatpush1.msra.mxu0 %v150
    %170 = vmatprep.subr.mxu0 0.0
    %171 = vmatpush1.msra.mxu0 %v151
    %172 = vmatprep.subr.mxu0 0.0
    %173 = vmatpush1.msra.mxu0 %v152
    %174 = vmatprep.subr.mxu0 0.0
    %175 = vmatpush1.msra.mxu0 %v153
    %176 = vmatprep.subr.mxu0 0.0
    %177 = vmatpush1.msra.mxu0 0.0
    %178 = vmatprep.subr.mxu0 0.0
    %179 = vmatpush1.msra.mxu0 0.0
    %180 = vmatprep.subr.mxu0 0.0
    %181 = vmatpush1.msra.mxu0 0.0
    %182 = vmatprep.subr.mxu0 0.0
    %183 = vmatpush1.msra.mxu0 0.0
    %184 = vmatprep.subr.mxu0 0.0
    %185 = vmatpush1.msra.mxu0 0.0
    %186 = vmatprep.subr.mxu0 0.0
    %187 = vmatpush1.msra.mxu0 0.0
    %188 = vmatprep.subr.mxu0 0.0
    %189 = vmatpush1.msra.mxu0 0.0
    %190 = vmatprep.subr.mxu0 0.0
    %191 = vmatpush1.msra.mxu0 0.0
    %192 = vmatprep.subr.mxu0 0.0
    %193 = vmatpush1.msra.mxu0 0.0
    %194 = vmatprep.subr.mxu0 0.0
    %195 = vmatpush1.msra.mxu0 0.0
    %196 = vmatprep.subr.mxu0 0.0
    %197 = vmatpush1.msra.mxu0 0.0
    %198 = vmatprep.subr.mxu0 0.0
    %199 = vmatpush1.msra.mxu0 0.0
    %200 = vmatprep.subr.mxu0 0.0
    %201 = vmatpush1.msra.mxu0 0.0
    %202 = vmatprep.subr.mxu0 0.0
    %203 = vmatpush1.msra.mxu0 0.0
    %204 = vmatprep.subr.mxu0 0.0
    %205 = vmatpush1.msra.mxu0 0.0
    %206 = vmatprep.subr.mxu0 0.0
    %207 = vmatpush1.msra.mxu0 0.0
    %208 = vmatprep.subr.mxu0 0.0
    %209 = vmatpush1.msra.mxu0 0.0
    %210 = vmatprep.subr.mxu0 0.0
    %211 = vmatpush1.msra.mxu0 0.0
    %212 = vmatprep.subr.mxu0 0.0
    %213 = vmatpush1.msra.mxu0 0.0
    %214 = vmatprep.subr.mxu0 0.0
    %215 = vmatpush1.msra.mxu0 0.0
    %216 = vmatprep.subr.mxu0 0.0
    %217 = vmatpush1.msra.mxu0 0.0
    %218 = vmatprep.subr.mxu0 0.0
    %219 = vmatpush1.msra.mxu0 0.0
    %220 = vmatprep.subr.mxu0 0.0
    %221 = vmatpush1.msra.mxu0 0.0
    %222 = vmatprep.subr.mxu0 0.0
    %223 = vmatpush1.msra.mxu0 0.0
    %224 = vmatprep.subr.mxu0 0.0
    %225 = vmatpush1.msra.mxu0 0.0
    %226 = vmatprep.subr.mxu0 0.0
    %227 = vmatpush1.msra.mxu0 0.0
    %228 = vmatprep.subr.mxu0 0.0
    %229 = vmatpush1.msra.mxu0 0.0
    %230 = vmatprep.subr.mxu0 0.0
    %231 = vmatpush1.msra.mxu0 0.0
    %232 = vmatprep.mubr.f32.mxu0 0.0
    %233 = vmatmul.mubr.f32.gmra.mrb[0].mxu0 %v163
    %v234 = vpop.f32.mrb[0].mxu0
    %v235 = vadd.f32 %v159, %v234
    %v236 = vpop.f32.mrb[0].mxu0
    %237 = vmatprep.mubr.f32.mxu0 0.0
    %238 = vmatmul.mubr.f32.gmra.mrb[0].mxu0 %v166
    %v239 = vpop.f32.mrb[0].mxu0
    %v240 = vadd.f32 %v159, %v239
    %v241 = vpop.f32.mrb[0].mxu0
    %242 = vdwg.mxu0
    %v243 = vld [vmem:[#allocation8] sm:$0xff]
    %v244 = vld [vmem:[#allocation8 + $0x8] sm:$0xff]
    %v245 = vld [vmem:[#allocation8 + $0x10] sm:$0xff]
    %v246 = vld [vmem:[#allocation8 + $0x18] sm:$0xff]
    %v247 = vld [vmem:[%s6] sm:$0x1]
    %v249 = vlaneseq
    %v250 = vshrl.u32 %v249, 7
    %v251 = vsub.s32 0, %v250
    %v252 = vrot.slane %v247, %v251
    %v255 = vsel %vm161, %v146, 0
    %v258 = vsel %vm161, %v147, 0
    %260 = vmatprep.subr.mxu0 0.0
    %261 = vmatpush1.msra.mxu0 %v243
    %262 = vmatprep.subr.mxu0 0.0
    %263 = vmatpush1.msra.mxu0 %v244
    %264 = vmatprep.subr.mxu0 0.0
    %265 = vmatpush1.msra.mxu0 %v245
    %266 = vmatprep.subr.mxu0 0.0
    %267 = vmatpush1.msra.mxu0 %v246
    %268 = vmatprep.subr.mxu0 0.0
    %269 = vmatpush1.msra.mxu0 0.0
    %270 = vmatprep.subr.mxu0 0.0
    %271 = vmatpush1.msra.mxu0 0.0
    %272 = vmatprep.subr.mxu0 0.0
    %273 = vmatpush1.msra.mxu0 0.0
    %274 = vmatprep.subr.mxu0 0.0
    %275 = vmatpush1.msra.mxu0 0.0
    %276 = vmatprep.subr.mxu0 0.0
    %277 = vmatpush1.msra.mxu0 0.0
    %278 = vmatprep.subr.mxu0 0.0
    %279 = vmatpush1.msra.mxu0 0.0
    %280 = vmatprep.subr.mxu0 0.0
    %281 = vmatpush1.msra.mxu0 0.0
    %282 = vmatprep.subr.mxu0 0.0
    %283 = vmatpush1.msra.mxu0 0.0
    %284 = vmatprep.subr.mxu0 0.0
    %285 = vmatpush1.msra.mxu0 0.0
    %286 = vmatprep.subr.mxu0 0.0
    %287 = vmatpush1.msra.mxu0 0.0
    %288 = vmatprep.subr.mxu0 0.0
    %289 = vmatpush1.msra.mxu0 0.0
    %290 = vmatprep.subr.mxu0 0.0
    %291 = vmatpush1.msra.mxu0 0.0
    %292 = vmatprep.subr.mxu0 0.0
    %293 = vmatpush1.msra.mxu0 0.0
    %294 = vmatprep.subr.mxu0 0.0
    %295 = vmatpush1.msra.mxu0 0.0
    %296 = vmatprep.subr.mxu0 0.0
    %297 = vmatpush1.msra.mxu0 0.0
    %298 = vmatprep.subr.mxu0 0.0
    %299 = vmatpush1.msra.mxu0 0.0
    %300 = vmatprep.subr.mxu0 0.0
    %301 = vmatpush1.msra.mxu0 0.0
    %302 = vmatprep.subr.mxu0 0.0
    %303 = vmatpush1.msra.mxu0 0.0
    %304 = vmatprep.subr.mxu0 0.0
    %305 = vmatpush1.msra.mxu0 0.0
    %306 = vmatprep.subr.mxu0 0.0
    %307 = vmatpush1.msra.mxu0 0.0
    %308 = vmatprep.subr.mxu0 0.0
    %309 = vmatpush1.msra.mxu0 0.0
    %310 = vmatprep.subr.mxu0 0.0
    %311 = vmatpush1.msra.mxu0 0.0
    %312 = vmatprep.subr.mxu0 0.0
    %313 = vmatpush1.msra.mxu0 0.0
    %314 = vmatprep.subr.mxu0 0.0
    %315 = vmatpush1.msra.mxu0 0.0
    %316 = vmatprep.subr.mxu0 0.0
    %317 = vmatpush1.msra.mxu0 0.0
    %318 = vmatprep.subr.mxu0 0.0
    %319 = vmatpush1.msra.mxu0 0.0
    %320 = vmatprep.subr.mxu0 0.0
    %321 = vmatpush1.msra.mxu0 0.0
    %322 = vmatprep.subr.mxu0 0.0
    %323 = vmatpush1.msra.mxu0 0.0
    %324 = vmatprep.mubr.f32.mxu0 0.0
    %325 = vmatmul.mubr.f32.gmra.mrb[0].mxu0 %v255
    %v326 = vpop.f32.mrb[0].mxu0
    %v327 = vadd.f32 %v252, %v326
    %v328 = vpop.f32.mrb[0].mxu0
    %329 = vmatprep.mubr.f32.mxu0 0.0
    %330 = vmatmul.mubr.f32.gmra.mrb[0].mxu0 %v258
    %v331 = vpop.f32.mrb[0].mxu0
    %v332 = vadd.f32 %v252, %v331
    %v333 = vpop.f32.mrb[0].mxu0
    %334 = vdwg.mxu0
    %v335 = vld [vmem:[#allocation10] sm:$0xff]
    %v336 = vld [vmem:[#allocation10 + $0x8] sm:$0xff]
    %v337 = vld [vmem:[#allocation10 + $0x10] sm:$0xff]
    %v338 = vld [vmem:[#allocation10 + $0x18] sm:$0xff]
    %v339 = vld [vmem:[#allocation11] sm:$0x1]
    %v341 = vlaneseq
    %v342 = vshrl.u32 %v341, 7
    %v343 = vsub.s32 0, %v342
    %v344 = vrot.slane %v339, %v343
    %v347 = vsel %vm161, %v148, 0
    %v350 = vsel %vm161, %v149, 0
    %352 = vmatprep.subr.mxu0 0.0
    %353 = vmatpush1.msra.mxu0 %v335
    %354 = vmatprep.subr.mxu0 0.0
    %355 = vmatpush1.msra.mxu0 %v336
    %356 = vmatprep.subr.mxu0 0.0
    %357 = vmatpush1.msra.mxu0 %v337
    %358 = vmatprep.subr.mxu0 0.0
    %359 = vmatpush1.msra.mxu0 %v338
    %360 = vmatprep.subr.mxu0 0.0
    %361 = vmatpush1.msra.mxu0 0.0
    %362 = vmatprep.subr.mxu0 0.0
    %363 = vmatpush1.msra.mxu0 0.0
    %364 = vmatprep.subr.mxu0 0.0
    %365 = vmatpush1.msra.mxu0 0.0
    %366 = vmatprep.subr.mxu0 0.0
    %367 = vmatpush1.msra.mxu0 0.0
    %368 = vmatprep.subr.mxu0 0.0
    %369 = vmatpush1.msra.mxu0 0.0
    %370 = vmatprep.subr.mxu0 0.0
    %371 = vmatpush1.msra.mxu0 0.0
    %372 = vmatprep.subr.mxu0 0.0
    %373 = vmatpush1.msra.mxu0 0.0
    %374 = vmatprep.subr.mxu0 0.0
    %375 = vmatpush1.msra.mxu0 0.0
    %376 = vmatprep.subr.mxu0 0.0
    %377 = vmatpush1.msra.mxu0 0.0
    %378 = vmatprep.subr.mxu0 0.0
    %379 = vmatpush1.msra.mxu0 0.0
    %380 = vmatprep.subr.mxu0 0.0
    %381 = vmatpush1.msra.mxu0 0.0
    %382 = vmatprep.subr.mxu0 0.0
    %383 = vmatpush1.msra.mxu0 0.0
    %384 = vmatprep.subr.mxu0 0.0
    %385 = vmatpush1.msra.mxu0 0.0
    %386 = vmatprep.subr.mxu0 0.0
    %387 = vmatpush1.msra.mxu0 0.0
    %388 = vmatprep.subr.mxu0 0.0
    %389 = vmatpush1.msra.mxu0 0.0
    %390 = vmatprep.subr.mxu0 0.0
    %391 = vmatpush1.msra.mxu0 0.0
    %392 = vmatprep.subr.mxu0 0.0
    %393 = vmatpush1.msra.mxu0 0.0
    %394 = vmatprep.subr.mxu0 0.0
    %395 = vmatpush1.msra.mxu0 0.0
    %396 = vmatprep.subr.mxu0 0.0
    %397 = vmatpush1.msra.mxu0 0.0
    %398 = vmatprep.subr.mxu0 0.0
    %399 = vmatpush1.msra.mxu0 0.0
    %400 = vmatprep.subr.mxu0 0.0
    %401 = vmatpush1.msra.mxu0 0.0
    %402 = vmatprep.subr.mxu0 0.0
    %403 = vmatpush1.msra.mxu0 0.0
    %404 = vmatprep.subr.mxu0 0.0
    %405 = vmatpush1.msra.mxu0 0.0
    %406 = vmatprep.subr.mxu0 0.0
    %407 = vmatpush1.msra.mxu0 0.0
    %408 = vmatprep.subr.mxu0 0.0
    %409 = vmatpush1.msra.mxu0 0.0
    %410 = vmatprep.subr.mxu0 0.0
    %411 = vmatpush1.msra.mxu0 0.0
    %412 = vmatprep.subr.mxu0 0.0
    %413 = vmatpush1.msra.mxu0 0.0
    %414 = vmatprep.subr.mxu0 0.0
    %415 = vmatpush1.msra.mxu0 0.0
    %416 = vmatprep.mubr.f32.mxu0 0.0
    %417 = vmatmul.mubr.f32.gmra.mrb[0].mxu0 %v347
    %v418 = vpop.f32.mrb[0].mxu0
    %v419 = vadd.f32 %v344, %v418
    %v420 = vpop.f32.mrb[0].mxu0
    %421 = vmatprep.mubr.f32.mxu0 0.0
    %422 = vmatmul.mubr.f32.gmra.mrb[0].mxu0 %v350
    %v423 = vpop.f32.mrb[0].mxu0
    %v424 = vadd.f32 %v344, %v423
    %v425 = vpop.f32.mrb[0].mxu0
    %426 = vdwg.mxu0
    %v427 = vlaneseq
    %v428 = vshrl.u32 %v427, 7
    %v429 = vlaneseq
    %v430 = vand.u32 %v429, 127
    %vm431 = vcmp.le.s32.totalorder %v430, %v428
    %v433 = vsel %vm161, %v235, 0
    %v436 = vsel %vm161, %v327, 0
    %438 = vmatprep.subr.mxu0 0.0
    %439 = vmatpush1.xpose.msra.mxu0 %v436
    %440 = vmatprep.subr.mxu0 0.0
    %441 = vmatpush1.xpose.msra.mxu0 0.0
    %442 = vmatprep.subr.mxu0 0.0
    %443 = vmatpush1.xpose.msra.mxu0 0.0
    %444 = vmatprep.subr.mxu0 0.0
    %445 = vmatpush1.xpose.msra.mxu0 0.0
    %446 = vmatprep.subr.mxu0 0.0
    %447 = vmatpush1.xpose.msra.mxu0 0.0
    %448 = vmatprep.subr.mxu0 0.0
    %449 = vmatpush1.xpose.msra.mxu0 0.0
    %450 = vmatprep.subr.mxu0 0.0
    %451 = vmatpush1.xpose.msra.mxu0 0.0
    %452 = vmatprep.subr.mxu0 0.0
    %453 = vmatpush1.xpose.msra.mxu0 0.0
    %454 = vmatprep.subr.mxu0 0.0
    %455 = vmatpush1.xpose.msra.mxu0 0.0
    %456 = vmatprep.subr.mxu0 0.0
    %457 = vmatpush1.xpose.msra.mxu0 0.0
    %458 = vmatprep.subr.mxu0 0.0
    %459 = vmatpush1.xpose.msra.mxu0 0.0
    %460 = vmatprep.subr.mxu0 0.0
    %461 = vmatpush1.xpose.msra.mxu0 0.0
    %462 = vmatprep.subr.mxu0 0.0
    %463 = vmatpush1.xpose.msra.mxu0 0.0
    %464 = vmatprep.subr.mxu0 0.0
    %465 = vmatpush1.xpose.msra.mxu0 0.0
    %466 = vmatprep.subr.mxu0 0.0
    %467 = vmatpush1.xpose.msra.mxu0 0.0
    %468 = vmatprep.subr.mxu0 0.0
    %469 = vmatpush1.xpose.msra.mxu0 0.0
    %470 = vmatprep.subr.mxu0 0.0
    %471 = vmatpush1.xpose.msra.mxu0 0.0
    %472 = vmatprep.subr.mxu0 0.0
    %473 = vmatpush1.xpose.msra.mxu0 0.0
    %474 = vmatprep.subr.mxu0 0.0
    %475 = vmatpush1.xpose.msra.mxu0 0.0
    %476 = vmatprep.subr.mxu0 0.0
    %477 = vmatpush1.xpose.msra.mxu0 0.0
    %478 = vmatprep.subr.mxu0 0.0
    %479 = vmatpush1.xpose.msra.mxu0 0.0
    %480 = vmatprep.subr.mxu0 0.0
    %481 = vmatpush1.xpose.msra.mxu0 0.0
    %482 = vmatprep.subr.mxu0 0.0
    %483 = vmatpush1.xpose.msra.mxu0 0.0
    %484 = vmatprep.subr.mxu0 0.0
    %485 = vmatpush1.xpose.msra.mxu0 0.0
    %486 = vmatprep.subr.mxu0 0.0
    %487 = vmatpush1.xpose.msra.mxu0 0.0
    %488 = vmatprep.subr.mxu0 0.0
    %489 = vmatpush1.xpose.msra.mxu0 0.0
    %490 = vmatprep.subr.mxu0 0.0
    %491 = vmatpush1.xpose.msra.mxu0 0.0
    %492 = vmatprep.subr.mxu0 0.0
    %493 = vmatpush1.xpose.msra.mxu0 0.0
    %494 = vmatprep.subr.mxu0 0.0
    %495 = vmatpush1.xpose.msra.mxu0 0.0
    %496 = vmatprep.subr.mxu0 0.0
    %497 = vmatpush1.xpose.msra.mxu0 0.0
    %498 = vmatprep.subr.mxu0 0.0
    %499 = vmatpush1.xpose.msra.mxu0 0.0
    %500 = vmatprep.subr.mxu0 0.0
    %501 = vmatpush1.xpose.msra.mxu0 0.0
    %502 = vmatprep.mubr.f32.mxu0 0.0
    %503 = vmatmul.mubr.f32.gmra.mrb[0].mxu0 %v433
    %v504 = vpop.f32.mrb[0].mxu0
    %v505 = vadd.f32 0.0, %v504
    %v506 = vpop.f32.mrb[0].mxu0
    %507 = vdwg.mxu0
    %v509 = vsel %vm161, %v240, 0
    %v512 = vsel %vm161, %v332, 0
    %514 = vmatprep.subr.mxu0 0.0
    %515 = vmatpush1.xpose.msra.mxu0 %v512
    %516 = vmatprep.subr.mxu0 0.0
    %517 = vmatpush1.xpose.msra.mxu0 0.0
    %518 = vmatprep.subr.mxu0 0.0
    %519 = vmatpush1.xpose.msra.mxu0 0.0
    %520 = vmatprep.subr.mxu0 0.0
    %521 = vmatpush1.xpose.msra.mxu0 0.0
    %522 = vmatprep.subr.mxu0 0.0
    %523 = vmatpush1.xpose.msra.mxu0 0.0
    %524 = vmatprep.subr.mxu0 0.0
    %525 = vmatpush1.xpose.msra.mxu0 0.0
    %526 = vmatprep.subr.mxu0 0.0
    %527 = vmatpush1.xpose.msra.mxu0 0.0
    %528 = vmatprep.subr.mxu0 0.0
    %529 = vmatpush1.xpose.msra.mxu0 0.0
    %530 = vmatprep.subr.mxu0 0.0
    %531 = vmatpush1.xpose.msra.mxu0 0.0
    %532 = vmatprep.subr.mxu0 0.0
    %533 = vmatpush1.xpose.msra.mxu0 0.0
    %534 = vmatprep.subr.mxu0 0.0
    %535 = vmatpush1.xpose.msra.mxu0 0.0
    %536 = vmatprep.subr.mxu0 0.0
    %537 = vmatpush1.xpose.msra.mxu0 0.0
    %538 = vmatprep.subr.mxu0 0.0
    %539 = vmatpush1.xpose.msra.mxu0 0.0
    %540 = vmatprep.subr.mxu0 0.0
    %541 = vmatpush1.xpose.msra.mxu0 0.0
    %542 = vmatprep.subr.mxu0 0.0
    %543 = vmatpush1.xpose.msra.mxu0 0.0
    %544 = vmatprep.subr.mxu0 0.0
    %545 = vmatpush1.xpose.msra.mxu0 0.0
    %546 = vmatprep.subr.mxu0 0.0
    %547 = vmatpush1.xpose.msra.mxu0 0.0
    %548 = vmatprep.subr.mxu0 0.0
    %549 = vmatpush1.xpose.msra.mxu0 0.0
    %550 = vmatprep.subr.mxu0 0.0
    %551 = vmatpush1.xpose.msra.mxu0 0.0
    %552 = vmatprep.subr.mxu0 0.0
    %553 = vmatpush1.xpose.msra.mxu0 0.0
    %554 = vmatprep.subr.mxu0 0.0
    %555 = vmatpush1.xpose.msra.mxu0 0.0
    %556 = vmatprep.subr.mxu0 0.0
    %557 = vmatpush1.xpose.msra.mxu0 0.0
    %558 = vmatprep.subr.mxu0 0.0
    %559 = vmatpush1.xpose.msra.mxu0 0.0
    %560 = vmatprep.subr.mxu0 0.0
    %561 = vmatpush1.xpose.msra.mxu0 0.0
    %562 = vmatprep.subr.mxu0 0.0
    %563 = vmatpush1.xpose.msra.mxu0 0.0
    %564 = vmatprep.subr.mxu0 0.0
    %565 = vmatpush1.xpose.msra.mxu0 0.0
    %566 = vmatprep.subr.mxu0 0.0
    %567 = vmatpush1.xpose.msra.mxu0 0.0
    %568 = vmatprep.subr.mxu0 0.0
    %569 = vmatpush1.xpose.msra.mxu0 0.0
    %570 = vmatprep.subr.mxu0 0.0
    %571 = vmatpush1.xpose.msra.mxu0 0.0
    %572 = vmatprep.subr.mxu0 0.0
    %573 = vmatpush1.xpose.msra.mxu0 0.0
    %574 = vmatprep.subr.mxu0 0.0
    %575 = vmatpush1.xpose.msra.mxu0 0.0
    %576 = vmatprep.subr.mxu0 0.0
    %577 = vmatpush1.xpose.msra.mxu0 0.0
    %578 = vmatprep.mubr.f32.mxu0 0.0
    %579 = vmatmul.mubr.f32.gmra.mrb[0].mxu0 %v509
    %v580 = vpop.f32.mrb[0].mxu0
    %v581 = vadd.f32 0.0, %v580
    %v582 = vpop.f32.mrb[0].mxu0
    %583 = vdwg.mxu0
    %v584 = vsel %vm431, 1, 0
    %vm585 = vcmp.eq.s32.totalorder %v584, 1
    %v586 = vsel %vm585, %v505, -1e+30
    %v587 = vsel %vm585, %v581, -1e+30
    %vm588 = vcmask 64512
    %v589 = vsel %vm588, %v586, -inf
    %590 = vmax.xlane.f32.xlu0 %v589
    %v591 = vpop.xlane.xlu0 %590
    %v592 = vsel %vm588, %v587, -inf
    %593 = vmax.xlane.f32.xlu0 %v592
    %v594 = vpop.xlane.xlu0 %593
    %v595 = vsub.f32 %v586, %v591
    %v596 = vsub.f32 %v587, %v594
    %v597 = vmul.f32 %v595, 1.442695
    %v598 = vpow.pop %v597
    %v599 = vmul.f32 %v596, 1.442695
    %v600 = vpow.pop %v599
    %v601 = vsel %vm588, %v598, 0.0
    %602 = vadd.xlane.f32.xlu0 %v601
    %v603 = vpop.xlane.xlu0 %602
    %v604 = vsel %vm588, %v600, 0.0
    %605 = vadd.xlane.f32.xlu0 %v604
    %v606 = vpop.xlane.xlu0 %605
    %v607 = vrcp.pop %v603
    %v608 = vrcp.pop %v606
    %v609 = vmul.f32 %v598, %v607
    %v610 = vmul.f32 %v600, %v608
    %v612 = vsel %vm588, %v609, 0
    %614 = vmatprep.subr.mxu0 0.0
    %615 = vmatpush1.msra.mxu0 %v419
    %616 = vmatprep.subr.mxu0 0.0
    %617 = vmatpush1.msra.mxu0 0.0
    %618 = vmatprep.subr.mxu0 0.0
    %619 = vmatpush1.msra.mxu0 0.0
    %620 = vmatprep.subr.mxu0 0.0
    %621 = vmatpush1.msra.mxu0 0.0
    %622 = vmatprep.subr.mxu0 0.0
    %623 = vmatpush1.msra.mxu0 0.0
    %624 = vmatprep.subr.mxu0 0.0
    %625 = vmatpush1.msra.mxu0 0.0
    %626 = vmatprep.subr.mxu0 0.0
    %627 = vmatpush1.msra.mxu0 0.0
    %628 = vmatprep.subr.mxu0 0.0
    %629 = vmatpush1.msra.mxu0 0.0
    %630 = vmatprep.subr.mxu0 0.0
    %631 = vmatpush1.msra.mxu0 0.0
    %632 = vmatprep.subr.mxu0 0.0
    %633 = vmatpush1.msra.mxu0 0.0
    %634 = vmatprep.subr.mxu0 0.0
    %635 = vmatpush1.msra.mxu0 0.0
    %636 = vmatprep.subr.mxu0 0.0
    %637 = vmatpush1.msra.mxu0 0.0
    %638 = vmatprep.subr.mxu0 0.0
    %639 = vmatpush1.msra.mxu0 0.0
    %640 = vmatprep.subr.mxu0 0.0
    %641 = vmatpush1.msra.mxu0 0.0
    %642 = vmatprep.subr.mxu0 0.0
    %643 = vmatpush1.msra.mxu0 0.0
    %644 = vmatprep.subr.mxu0 0.0
    %645 = vmatpush1.msra.mxu0 0.0
    %646 = vmatprep.subr.mxu0 0.0
    %647 = vmatpush1.msra.mxu0 0.0
    %648 = vmatprep.subr.mxu0 0.0
    %649 = vmatpush1.msra.mxu0 0.0
    %650 = vmatprep.subr.mxu0 0.0
    %651 = vmatpush1.msra.mxu0 0.0
    %652 = vmatprep.subr.mxu0 0.0
    %653 = vmatpush1.msra.mxu0 0.0
    %654 = vmatprep.subr.mxu0 0.0
    %655 = vmatpush1.msra.mxu0 0.0
    %656 = vmatprep.subr.mxu0 0.0
    %657 = vmatpush1.msra.mxu0 0.0
    %658 = vmatprep.subr.mxu0 0.0
    %659 = vmatpush1.msra.mxu0 0.0
    %660 = vmatprep.subr.mxu0 0.0
    %661 = vmatpush1.msra.mxu0 0.0
    %662 = vmatprep.subr.mxu0 0.0
    %663 = vmatpush1.msra.mxu0 0.0
    %664 = vmatprep.subr.mxu0 0.0
    %665 = vmatpush1.msra.mxu0 0.0
    %666 = vmatprep.subr.mxu0 0.0
    %667 = vmatpush1.msra.mxu0 0.0
    %668 = vmatprep.subr.mxu0 0.0
    %669 = vmatpush1.msra.mxu0 0.0
    %670 = vmatprep.subr.mxu0 0.0
    %671 = vmatpush1.msra.mxu0 0.0
    %672 = vmatprep.subr.mxu0 0.0
    %673 = vmatpush1.msra.mxu0 0.0
    %674 = vmatprep.subr.mxu0 0.0
    %675 = vmatpush1.msra.mxu0 0.0
    %676 = vmatprep.subr.mxu0 0.0
    %677 = vmatpush1.msra.mxu0 0.0
    %678 = vmatprep.mubr.f32.mxu0 0.0
    %679 = vmatmul.mubr.f32.gmra.mrb[0].mxu0 %v612
    %v680 = vpop.f32.mrb[0].mxu0
    %v681 = vadd.f32 0.0, %v680
    %v682 = vpop.f32.mrb[0].mxu0
    %683 = vdwg.mxu0
    %v685 = vsel %vm588, %v610, 0
    %687 = vmatprep.subr.mxu0 0.0
    %688 = vmatpush1.msra.mxu0 %v424
    %689 = vmatprep.subr.mxu0 0.0
    %690 = vmatpush1.msra.mxu0 0.0
    %691 = vmatprep.subr.mxu0 0.0
    %692 = vmatpush1.msra.mxu0 0.0
    %693 = vmatprep.subr.mxu0 0.0
    %694 = vmatpush1.msra.mxu0 0.0
    %695 = vmatprep.subr.mxu0 0.0
    %696 = vmatpush1.msra.mxu0 0.0
    %697 = vmatprep.subr.mxu0 0.0
    %698 = vmatpush1.msra.mxu0 0.0
    %699 = vmatprep.subr.mxu0 0.0
    %700 = vmatpush1.msra.mxu0 0.0
    %701 = vmatprep.subr.mxu0 0.0
    %702 = vmatpush1.msra.mxu0 0.0
    %703 = vmatprep.subr.mxu0 0.0
    %704 = vmatpush1.msra.mxu0 0.0
    %705 = vmatprep.subr.mxu0 0.0
    %706 = vmatpush1.msra.mxu0 0.0
    %707 = vmatprep.subr.mxu0 0.0
    %708 = vmatpush1.msra.mxu0 0.0
    %709 = vmatprep.subr.mxu0 0.0
    %710 = vmatpush1.msra.mxu0 0.0
    %711 = vmatprep.subr.mxu0 0.0
    %712 = vmatpush1.msra.mxu0 0.0
    %713 = vmatprep.subr.mxu0 0.0
    %714 = vmatpush1.msra.mxu0 0.0
    %715 = vmatprep.subr.mxu0 0.0
    %716 = vmatpush1.msra.mxu0 0.0
    %717 = vmatprep.subr.mxu0 0.0
    %718 = vmatpush1.msra.mxu0 0.0
    %719 = vmatprep.subr.mxu0 0.0
    %720 = vmatpush1.msra.mxu0 0.0
    %721 = vmatprep.subr.mxu0 0.0
    %722 = vmatpush1.msra.mxu0 0.0
    %723 = vmatprep.subr.mxu0 0.0
    %724 = vmatpush1.msra.mxu0 0.0
    %725 = vmatprep.subr.mxu0 0.0
    %726 = vmatpush1.msra.mxu0 0.0
    %727 = vmatprep.subr.mxu0 0.0
    %728 = vmatpush1.msra.mxu0 0.0
    %729 = vmatprep.subr.mxu0 0.0
    %730 = vmatpush1.msra.mxu0 0.0
    %731 = vmatprep.subr.mxu0 0.0
    %732 = vmatpush1.msra.mxu0 0.0
    %733 = vmatprep.subr.mxu0 0.0
    %734 = vmatpush1.msra.mxu0 0.0
    %735 = vmatprep.subr.mxu0 0.0
    %736 = vmatpush1.msra.mxu0 0.0
    %737 = vmatprep.subr.mxu0 0.0
    %738 = vmatpush1.msra.mxu0 0.0
    %739 = vmatprep.subr.mxu0 0.0
    %740 = vmatpush1.msra.mxu0 0.0
    %741 = vmatprep.subr.mxu0 0.0
    %742 = vmatpush1.msra.mxu0 0.0
    %743 = vmatprep.subr.mxu0 0.0
    %744 = vmatpush1.msra.mxu0 0.0
    %745 = vmatprep.subr.mxu0 0.0
    %746 = vmatpush1.msra.mxu0 0.0
    %747 = vmatprep.subr.mxu0 0.0
    %748 = vmatpush1.msra.mxu0 0.0
    %749 = vmatprep.subr.mxu0 0.0
    %750 = vmatpush1.msra.mxu0 0.0
    %751 = vmatprep.mubr.f32.mxu0 0.0
    %752 = vmatmul.mubr.f32.gmra.mrb[0].mxu0 %v685
    %v753 = vpop.f32.mrb[0].mxu0
    %v754 = vadd.f32 0.0, %v753
    %v755 = vpop.f32.mrb[0].mxu0
    %756 = vdwg.mxu0
    %v757 = vld [vmem:[#allocation13] sm:$0xff]
    %v758 = vld [vmem:[#allocation13 + $0x8] sm:$0xff]
    %v759 = vld [vmem:[#allocation13 + $0x10] sm:$0xff]
    %v760 = vld [vmem:[#allocation13 + $0x18] sm:$0xff]
    %v761 = vld [vmem:[#allocation14] sm:$0x1]
    %v763 = vlaneseq
    %v764 = vshrl.u32 %v763, 7
    %v765 = vsub.s32 0, %v764
    %v766 = vrot.slane %v761, %v765
    %v769 = vsel %vm161, %v681, 0
    %v772 = vsel %vm161, %v754, 0
    %774 = vmatprep.subr.mxu0 0.0
    %775 = vmatpush1.msra.mxu0 %v757
    %776 = vmatprep.subr.mxu0 0.0
    %777 = vmatpush1.msra.mxu0 %v758
    %778 = vmatprep.subr.mxu0 0.0
    %779 = vmatpush1.msra.mxu0 %v759
    %780 = vmatprep.subr.mxu0 0.0
    %781 = vmatpush1.msra.mxu0 %v760
    %782 = vmatprep.subr.mxu0 0.0
    %783 = vmatpush1.msra.mxu0 0.0
    %784 = vmatprep.subr.mxu0 0.0
    %785 = vmatpush1.msra.mxu0 0.0
    %786 = vmatprep.subr.mxu0 0.0
    %787 = vmatpush1.msra.mxu0 0.0
    %788 = vmatprep.subr.mxu0 0.0
    %789 = vmatpush1.msra.mxu0 0.0
    %790 = vmatprep.subr.mxu0 0.0
    %791 = vmatpush1.msra.mxu0 0.0
    %792 = vmatprep.subr.mxu0 0.0
    %793 = vmatpush1.msra.mxu0 0.0
    %794 = vmatprep.subr.mxu0 0.0
    %795 = vmatpush1.msra.mxu0 0.0
    %796 = vmatprep.subr.mxu0 0.0
    %797 = vmatpush1.msra.mxu0 0.0
    %798 = vmatprep.subr.mxu0 0.0
    %799 = vmatpush1.msra.mxu0 0.0
    %800 = vmatprep.subr.mxu0 0.0
    %801 = vmatpush1.msra.mxu0 0.0
    %802 = vmatprep.subr.mxu0 0.0
    %803 = vmatpush1.msra.mxu0 0.0
    %804 = vmatprep.subr.mxu0 0.0
    %805 = vmatpush1.msra.mxu0 0.0
    %806 = vmatprep.subr.mxu0 0.0
    %807 = vmatpush1.msra.mxu0 0.0
    %808 = vmatprep.subr.mxu0 0.0
    %809 = vmatpush1.msra.mxu0 0.0
    %810 = vmatprep.subr.mxu0 0.0
    %811 = vmatpush1.msra.mxu0 0.0
    %812 = vmatprep.subr.mxu0 0.0
    %813 = vmatpush1.msra.mxu0 0.0
    %814 = vmatprep.subr.mxu0 0.0
    %815 = vmatpush1.msra.mxu0 0.0
    %816 = vmatprep.subr.mxu0 0.0
    %817 = vmatpush1.msra.mxu0 0.0
    %818 = vmatprep.subr.mxu0 0.0
    %819 = vmatpush1.msra.mxu0 0.0
    %820 = vmatprep.subr.mxu0 0.0
    %821 = vmatpush1.msra.mxu0 0.0
    %822 = vmatprep.subr.mxu0 0.0
    %823 = vmatpush1.msra.mxu0 0.0
    %824 = vmatprep.subr.mxu0 0.0
    %825 = vmatpush1.msra.mxu0 0.0
    %826 = vmatprep.subr.mxu0 0.0
    %827 = vmatpush1.msra.mxu0 0.0
    %828 = vmatprep.subr.mxu0 0.0
    %829 = vmatpush1.msra.mxu0 0.0
    %830 = vmatprep.subr.mxu0 0.0
    %831 = vmatpush1.msra.mxu0 0.0
    %832 = vmatprep.subr.mxu0 0.0
    %833 = vmatpush1.msra.mxu0 0.0
    %834 = vmatprep.subr.mxu0 0.0
    %835 = vmatpush1.msra.mxu0 0.0
    %836 = vmatprep.subr.mxu0 0.0
    %837 = vmatpush1.msra.mxu0 0.0
    %838 = vmatprep.mubr.f32.mxu0 0.0
    %839 = vmatmul.mubr.f32.gmra.mrb[0].mxu0 %v769
    %v840 = vpop.f32.mrb[0].mxu0
    %v841 = vadd.f32 %v766, %v840
    %v842 = vpop.f32.mrb[0].mxu0
    %843 = vmatprep.mubr.f32.mxu0 0.0
    %844 = vmatmul.mubr.f32.gmra.mrb[0].mxu0 %v772
    %v845 = vpop.f32.mrb[0].mxu0
    %v846 = vadd.f32 %v766, %v845
    %v847 = vpop.f32.mrb[0].mxu0
    %848 = vdwg.mxu0
    %849 = vst.msk [vmem:[#allocation16] sm:$0xff] %vm161, %v841
    %850 = vst.msk [vmem:[#allocation16 + $0x8] sm:$0xff] %vm161, %v846
    // Predicated region
    $region78: #{causal_self_attention.1} parent=1 // pred_check
      _
    $region79: #{causal_self_attention.1} parent=1 // pred_check_branch
      %852 = sbr.rel (0) target = $region81
    $region80: #{causal_self_attention.1} parent=1 // pred_region
      %s854 = ssub.s32 256, 256
      %855 = vsyncadd [#allocation4], %s854
      %s856 = sshll.u32 [#allocation16], 4
      %s857 = int_to_ptr.vmem [resolvable:$true] %s856
      %862 = dma.vmem_to_hbm [thread:$0]  %s857, 256, %s11, [#allocation4], 128, 128, 8
    $region81: #{causal_self_attention.1} parent=1 // pred_fallthru
      _
    // Predicated region
    $region82: #{causal_self_attention.1} parent=1 // pred_check
      _
    $region83: #{causal_self_attention.1} parent=1 // pred_check_branch
      %864 = sbr.rel (0) target = $region85
    $region84: #{causal_self_attention.1} parent=1 // pred_region
      %865 = dma.done [#allocation4], 256
    $region85: #{causal_self_attention.1} parent=1 // pred_fallthru
      _
    %866 = vsyncpa [#allocation3], 1
    %867 = vsyncpa [#allocation6], 1
    %868 = vsyncpa [#allocation9], 1
    %869 = vsyncpa [#allocation12], 1
    %870 = vsyncpa [#allocation15], 1
    %871 = vsyncpa [#allocation4], 1

</llo_original>
